<compile_context>
chip_gen: v6e
topology: v6e:2x2x1
jax: 0.10.0
libtpu: 0.0.40
codegen_flags: <defaults>
</compile_context>

<pallas_src>
import sys
import functools
import numpy as np
import jax
import jax.numpy as jnp
from jax import lax
from jax.experimental import pallas as pl
from jax.experimental.pallas import tpu as pltpu


def _round_up(x, m):
    return (x + m - 1) // m * m


# ----------------------------------------------------------------------------
# Parameter / basis construction (deterministic, pure numpy glue)
# ----------------------------------------------------------------------------
def make_stft_basis(sr, n_fft, f_min, f_max):
    """Hann-windowed DFT basis, cos/sin stacked into (2*F_pad, n_fft) f32."""
    n_freq = n_fft // 2 + 1
    freqs = np.linspace(0.0, sr // 2, n_freq)
    f_min_idx = int(np.searchsorted(freqs, f_min, side="left")) if f_min is not None else 0
    f_max_idx = int(np.searchsorted(freqs, f_max, side="right")) if f_max is not None else n_freq

    # periodic Hann window (== torch.hann_window default)
    n = np.arange(n_fft)
    window = 0.5 - 0.5 * np.cos(2.0 * np.pi * n / n_fft)

    k = np.arange(f_min_idx, f_max_idx)
    F = int(k.shape[0])
    F_pad = max(8, _round_up(F, 8))                            # sublane-aligned

    ang = 2.0 * np.pi * np.outer(k, n) / n_fft                 # (F, n_fft)
    stacked = np.zeros((2 * F_pad, n_fft), np.float32)
    stacked[:F] = np.cos(ang) * window[None, :]                # window folded in
    stacked[F_pad:F_pad + F] = np.sin(ang) * window[None, :]
    wsum = float(np.sum(window ** 2))                          # normalized=True
    return stacked, F, F_pad, wsum


# ----------------------------------------------------------------------------
# Pallas kernel: q small MXU matmuls + power/log tail + running temporal sum
# ----------------------------------------------------------------------------
def _stft_kernel(basis_ref, audio_ref, o_ref, *rest, q, tT, T_valid,
                 needs_tail_mask, inv_wsum, power, use_log,
                 log_floor, log_off, temporal_norm):
    t = pl.program_id(1)

    # audio_ref: (chunk, W) hop-chunked window for this time tile.
    # Accumulate q shifted (2*F_pad, chunk) @ (chunk, tT) matmuls in f32.
    acc = jnp.dot(basis_ref[0], audio_ref[:, 0:tT],
                  preferred_element_type=jnp.float32)
    for j in range(1, q):
        acc = acc + jnp.dot(basis_ref[j], audio_ref[:, j:j + tT],
                            preferred_element_type=jnp.float32)

    F_pad = acc.shape[0] // 2
    real = acc[:F_pad, :]
    imag = acc[F_pad:, :]
    mag2 = real * real + imag * imag

    if use_log:
        # 20/p * log10(max((|X|^2/wsum)^(p/2), eps))
        #   == 10*log10(max(|X|^2, wsum*eps^(2/p))) - 10*log10(wsum)
        spec = 10.0 * jnp.log10(jnp.maximum(mag2, log_floor)) - log_off
    else:
        spec = mag2 * inv_wsum
        if power == 1.0:
            spec = jnp.sqrt(spec)
        elif power != 2.0:
            spec = spec ** (power / 2.0)

    o_ref[...] = spec                                          # lane-dense tile

    if temporal_norm:
        sums_ref, acc_sum = rest

        @pl.when(t == 0)
        def _():
            acc_sum[...] = jnp.zeros_like(acc_sum)

        is_last = t == pl.num_programs(1) - 1
        if needs_tail_mask:
            # only the final tile contains padded time columns
            @pl.when(jnp.logical_not(is_last))
            def _():
                acc_sum[...] += jnp.sum(spec, axis=-1, keepdims=True)

            @pl.when(is_last)
            def _():
                col = t * tT + lax.broadcasted_iota(jnp.int32, spec.shape, 1)
                acc_sum[...] += jnp.sum(jnp.where(col < T_valid, spec, 0.0),
                                        axis=-1, keepdims=True)
        else:
            acc_sum[...] += jnp.sum(spec, axis=-1, keepdims=True)

        @pl.when(is_last)
        def _():
            sums_ref[...] = acc_sum[...]


# ----------------------------------------------------------------------------
# Wrapper
# ----------------------------------------------------------------------------
def stft_pallas(x, *, sr, n_fft, hop_length, power,
                f_min, f_max, use_log, temporal_norm):
    B, L = x.shape
    assert n_fft // 2 < L, "reflect padding requires n_fft // 2 < signal length"

    stacked, F, F_pad, wsum = make_stft_basis(sr, n_fft, f_min, f_max)

    # center=True, pad_mode='reflect'
    pad = n_fft // 2
    xp = jnp.pad(x.astype(jnp.float32), ((0, 0), (pad, pad)), mode="reflect")
    T = L // hop_length + 1

    # lane-dense time tiling
    tT = min(1024, _round_up(T, 128))
    nT = pl.cdiv(T, tT)
    T_pad = nT * tT

    if n_fft % hop_length == 0:
        # ---- hop-chunked path (no frame materialization) ----
        q = n_fft // hop_length
        chunk = hop_length
        W = tT + (_round_up(q - 1, 128) if q > 1 else 0)       # window width
        H_need = (nT - 1) * tT + W                             # hop columns needed
        need = H_need * chunk
        if xp.shape[1] < need:
            xp = jnp.pad(xp, ((0, 0), (0, need - xp.shape[1])))
        else:
            xp = xp[:, :need]
        # xc[b, s, h] = xp[b, h*chunk + s]
        xc = xp.reshape(B, H_need, chunk).transpose(0, 2, 1)   # (B, chunk, H_need)
        # pre-windowed per-tile slabs (static slices, small overlap duplication)
        audio = jnp.stack([xc[:, :, t * tT:t * tT + W] for t in range(nT)],
                          axis=1).astype(jnp.bfloat16)         # (B, nT, chunk, W)
    else:
        # ---- fallback: gather frames (hop does not divide n_fft) ----
        q = 1
        chunk = n_fft
        W = tT
        idx = np.arange(n_fft)[:, None] + np.arange(T)[None, :] * hop_length
        frames = xp[:, idx]                                    # (B, n_fft, T)
        frames = jnp.pad(frames, ((0, 0), (0, 0), (0, T_pad - T)))
        audio = frames.reshape(B, n_fft, nT, tT).transpose(0, 2, 1, 3)
        audio = audio.astype(jnp.bfloat16)                     # (B, nT, n_fft, tT)

    # basis pre-split into q chunk-wide column blocks: (q, 2*F_pad, chunk)
    basis = jnp.asarray(stacked.reshape(2 * F_pad, q, chunk).transpose(1, 0, 2),
                        dtype=jnp.bfloat16)

    eps = sys.float_info.epsilon                    # matches the torch module
    tiny = float(np.finfo(np.float32).tiny)
    log_floor = max(wsum * eps ** (2.0 / power), tiny)
    log_off = 10.0 * float(np.log10(wsum))

    kernel = functools.partial(
        _stft_kernel,
        q=q, tT=tT, T_valid=T,
        needs_tail_mask=(T_pad != T),
        inv_wsum=1.0 / wsum, power=power, use_log=use_log,
        log_floor=log_floor, log_off=log_off,
        temporal_norm=temporal_norm,
    )

    in_specs = [
        pl.BlockSpec((q, 2 * F_pad, chunk), lambda b, t: (0, 0, 0)),
        pl.BlockSpec((pl.Squeezed(), pl.Squeezed(), chunk, W),
                     lambda b, t: (b, t, 0, 0)),
    ]
    if temporal_norm:
        out_shape = (jax.ShapeDtypeStruct((B, F_pad, T_pad), jnp.float32),
                     jax.ShapeDtypeStruct((B, F_pad, 1), jnp.float32))
        out_specs = (pl.BlockSpec((pl.Squeezed(), F_pad, tT), lambda b, t: (b, 0, t)),
                     pl.BlockSpec((pl.Squeezed(), F_pad, 1), lambda b, t: (b, 0, 0)))
        scratch_shapes = (pltpu.VMEM((F_pad, 1), jnp.float32),)
        semantics = ("parallel", "arbitrary")      # running sum across t
    else:
        out_shape = jax.ShapeDtypeStruct((B, F_pad, T_pad), jnp.float32)
        out_specs = pl.BlockSpec((pl.Squeezed(), F_pad, tT), lambda b, t: (b, 0, t))
        scratch_shapes = ()
        semantics = ("parallel", "parallel")       # fully independent tiles

    # VMEM budget sized from the actual buffers (+ headroom for temporaries)
    def _al(n, m):
        return _round_up(n, m)
    basis_b = q * _al(2 * F_pad, 16) * _al(chunk, 128) * 2
    audio_b = _al(chunk, 16) * _al(W, 128) * 2
    out_b = _al(F_pad, 8) * _al(tT, 128) * 4
    sums_b = (_al(F_pad, 8) * 128 * 4) if temporal_norm else 0
    temps_b = (q * _al(chunk, 16) * _al(tT, 128) * 2          # shifted windows
               + _al(2 * F_pad, 8) * _al(tT, 128) * 4         # f32 accumulator
               + 3 * _al(F_pad, 8) * _al(tT, 128) * 4)        # mag2 / spec temps
    vmem_est = 2 * (basis_b + audio_b + out_b + sums_b) + sums_b + temps_b
    vmem_limit = int(min(127 * 1024 * 1024,
                         max(16 * 1024 * 1024, int(vmem_est * 1.5))))

    cost = pl.CostEstimate(
        flops=2 * B * (2 * F_pad) * n_fft * T_pad,
        transcendentals=(B * F_pad * T_pad) if use_log else 0,
        bytes_accessed=int(basis.size) * 2 + int(audio.size) * 2
                       + B * F_pad * T_pad * 4
                       + (B * F_pad * 4 if temporal_norm else 0),
    )

    result = pl.pallas_call(
        kernel,
        out_shape=out_shape,
        grid_spec=pltpu.PrefetchScalarGridSpec(
            num_scalar_prefetch=0,
            grid=(B, nT),
            in_specs=in_specs,
            out_specs=out_specs,
            scratch_shapes=scratch_shapes,
        ),
        compiler_params=pltpu.CompilerParams(
            dimension_semantics=semantics,
            vmem_limit_bytes=vmem_limit,
        ),
        cost_estimate=cost,
    )(basis, audio)

    # single fused post-pass: freq/time crop (+ mean subtraction)
    if temporal_norm:
        out, sums = result
        return out[:, :F, :T] - sums[:, :F, :] * (1.0 / T)
    return result[:, :F, :T]


# ----------------------------------------------------------------------------
# Pure-JAX reference (same bf16-rounded inputs, f32 math) for a spot-check.
# ----------------------------------------------------------------------------
def stft_ref(x, *, sr, n_fft, hop_length, power,
             f_min, f_max, use_log, temporal_norm):
    stacked, F, F_pad, wsum = make_stft_basis(sr, n_fft, f_min, f_max)
    basis_bf = jnp.asarray(stacked, jnp.bfloat16).astype(jnp.float32)
    cos_b = basis_bf[:F]
    sin_b = basis_bf[F_pad:F_pad + F]
    B, L = x.shape
    pad = n_fft // 2
    xp = jnp.pad(x.astype(jnp.float32), ((0, 0), (pad, pad)), mode="reflect")
    T = L // hop_length + 1
    idx = np.arange(n_fft)[:, None] + np.arange(T)[None, :] * hop_length
    frames = xp[:, idx].astype(jnp.bfloat16).astype(jnp.float32)  # match kernel
    real = jnp.einsum("fn,bnt->bft", cos_b, frames,
                      precision=lax.Precision.HIGHEST)
    imag = jnp.einsum("fn,bnt->bft", sin_b, frames,
                      precision=lax.Precision.HIGHEST)
    spec = (real * real + imag * imag) / wsum
    if power == 1.0:
        spec = jnp.sqrt(spec)
    elif power != 2.0:
        spec = spec ** (power / 2.0)
    if use_log:
        spec = (20.0 / power) * jnp.log10(
            jnp.maximum(spec, sys.float_info.epsilon))
    if temporal_norm:
        spec = spec - jnp.mean(spec, axis=-1, keepdims=True)
    return spec


if __name__ == "__main__":
    # Module config (use_mel=False branch)
    cfg = dict(sr=16000, n_fft=128, hop_length=64, power=2.0,
               f_min=500.0, f_max=4000.0, use_log=True, temporal_norm=True)

    B, L = 2, 512
    key = jax.random.PRNGKey(0)
    x = jax.random.normal(key, (B, L), dtype=jnp.float32)

    stft_fn = jax.jit(functools.partial(stft_pallas, **cfg))
    out = jax.block_until_ready(stft_fn(x))
    ref = jax.block_until_ready(stft_ref(x, **cfg))
    np.testing.assert_allclose(np.asarray(out), np.asarray(ref),
                               rtol=2e-2, atol=2e-2)

    print("KERNEL_OK")
</pallas_src>

<mosaic_0001>
module attributes {stable_mosaic.version = 11 : i64} {
  func.func @_stft_kernel(%arg0: i32, %arg1: i32, %arg2: memref<2x64x64xbf16, #tpu.memory_space<vmem>>, %arg3: memref<1x1x64x256xbf16, #tpu.memory_space<vmem>>, %arg4: memref<1x32x128xf32, #tpu.memory_space<vmem>>, %arg5: memref<1x32x1xf32, #tpu.memory_space<vmem>>, %arg6: memref<32x1xf32, #tpu.memory_space<vmem>>) attributes {dimension_semantics = [#tpu.dimension_semantics<parallel>, #tpu.dimension_semantics<arbitrary>], iteration_bounds = array<i64: 2, 1>, scalar_prefetch = 0 : i64, scratch_operands = 1 : i64, tpu.core_type = #tpu.core_type<tc>, window_params = [{pipeline_mode = #tpu.pipeline_mode<synchronous>, transform_indices = @transform_0, window_bounds = array<i64: 2, 64, 64>}, {transform_indices = @transform_1, window_bounds = array<i64: 1, 1, 64, 256>}, {transform_indices = @transform_2, window_bounds = array<i64: 1, 32, 128>}, {transform_indices = @transform_3, window_bounds = array<i64: 1, 32, 1>}]} {
    %c0 = arith.constant 0 : index
    %c0_0 = arith.constant 0 : index
    %c0_1 = arith.constant 0 : index
    %0 = vector.load %arg2[%c0, %c0_0, %c0_1] : memref<2x64x64xbf16, #tpu.memory_space<vmem>>, vector<1x64x64xbf16>
    %1 = vector.shape_cast %0 : vector<1x64x64xbf16> to vector<64x64xbf16>
    %c0_2 = arith.constant 0 : index
    %c0_3 = arith.constant 0 : index
    %c0_4 = arith.constant 0 : index
    %c0_5 = arith.constant 0 : index
    %2 = vector.load %arg3[%c0_2, %c0_3, %c0_4, %c0_5] : memref<1x1x64x256xbf16, #tpu.memory_space<vmem>>, vector<1x1x64x128xbf16>
    %3 = vector.shape_cast %2 : vector<1x1x64x128xbf16> to vector<64x128xbf16>
    %cst = arith.constant dense<0.000000e+00> : vector<64x128xf32>
    %4 = tpu.matmul %1, %3, %cst {dimension_numbers = #tpu.dot_dimension_numbers<[1], [0], [0], [1], [0, 0, 1, 1], [], []>} : vector<64x64xbf16>, vector<64x128xbf16>, vector<64x128xf32> -> vector<64x128xf32>
    %c1 = arith.constant 1 : index
    %c0_6 = arith.constant 0 : index
    %c0_7 = arith.constant 0 : index
    %5 = vector.load %arg2[%c1, %c0_6, %c0_7] : memref<2x64x64xbf16, #tpu.memory_space<vmem>>, vector<1x64x64xbf16>
    %6 = vector.shape_cast %5 : vector<1x64x64xbf16> to vector<64x64xbf16>
    %c0_8 = arith.constant 0 : index
    %c0_9 = arith.constant 0 : index
    %c0_10 = arith.constant 0 : index
    %c1_11 = arith.constant 1 : index
    %7 = vector.load %arg3[%c0_8, %c0_9, %c0_10, %c1_11] : memref<1x1x64x256xbf16, #tpu.memory_space<vmem>>, vector<1x1x64x128xbf16>
    %8 = vector.shape_cast %7 : vector<1x1x64x128xbf16> to vector<64x128xbf16>
    %cst_12 = arith.constant dense<0.000000e+00> : vector<64x128xf32>
    %9 = tpu.matmul %6, %8, %cst_12 {dimension_numbers = #tpu.dot_dimension_numbers<[1], [0], [0], [1], [0, 0, 1, 1], [], []>} : vector<64x64xbf16>, vector<64x128xbf16>, vector<64x128xf32> -> vector<64x128xf32>
    %10 = arith.addf %4, %9 : vector<64x128xf32>
    %11 = vector.extract_strided_slice %10 {offsets = [0, 0], sizes = [32, 128], strides = [1, 1]} : vector<64x128xf32> to vector<32x128xf32>
    %12 = vector.extract_strided_slice %10 {offsets = [32, 0], sizes = [32, 128], strides = [1, 1]} : vector<64x128xf32> to vector<32x128xf32>
    %13 = arith.mulf %11, %11 : vector<32x128xf32>
    %14 = arith.mulf %12, %12 : vector<32x128xf32>
    %15 = arith.addf %13, %14 : vector<32x128xf32>
    %cst_13 = arith.constant 1.0658141E-14 : f32
    %16 = vector.broadcast %cst_13 : f32 to vector<32x128xf32>
    %17 = arith.maximumf %15, %16 : vector<32x128xf32>
    %18 = math.log %17 : vector<32x128xf32>
    %cst_14 = arith.constant 0.434294492 : f32
    %19 = vector.broadcast %cst_14 : f32 to vector<32x128xf32>
    %20 = arith.mulf %18, %19 : vector<32x128xf32>
    %cst_15 = arith.constant 1.000000e+01 : f32
    %21 = vector.broadcast %cst_15 : f32 to vector<32x128xf32>
    %22 = arith.mulf %21, %20 : vector<32x128xf32>
    %cst_16 = arith.constant 16.8124123 : f32
    %23 = vector.broadcast %cst_16 : f32 to vector<32x128xf32>
    %24 = arith.subf %22, %23 : vector<32x128xf32>
    %c0_17 = arith.constant 0 : index
    %c0_18 = arith.constant 0 : index
    %c0_19 = arith.constant 0 : index
    %25 = vector.load %arg4[%c0_17, %c0_18, %c0_19] : memref<1x32x128xf32, #tpu.memory_space<vmem>>, vector<1x32x128xf32>
    %26 = vector.shape_cast %25 : vector<1x32x128xf32> to vector<32x128xf32>
    %27 = vector.shape_cast %24 : vector<32x128xf32> to vector<1x32x128xf32>
    tpu.vector_store %arg4[%c0_17, %c0_18, %c0_19], %27 {strides = array<i32>} : memref<1x32x128xf32, #tpu.memory_space<vmem>>, vector<1x32x128xf32>,
    %c0_i32 = arith.constant 0 : i32
    %28 = arith.cmpi eq, %arg1, %c0_i32 : i32
    %29 = arith.extui %28 : i1 to i32
    %c0_i32_20 = arith.constant 0 : i32
    %30 = arith.cmpi ne, %29, %c0_i32_20 : i32
    scf.if %30 {
      %cst_25 = arith.constant 0.000000e+00 : f32
      %39 = vector.broadcast %cst_25 : f32 to vector<32x1xf32>
      %c0_26 = arith.constant 0 : index
      %c0_27 = arith.constant 0 : index
      %40 = vector.load %arg6[%c0_26, %c0_27] : memref<32x1xf32, #tpu.memory_space<vmem>>, vector<32x1xf32>
      tpu.vector_store %arg6[%c0_26, %c0_27], %39 {strides = array<i32>} : memref<32x1xf32, #tpu.memory_space<vmem>>, vector<32x1xf32>,
    } else {
    }
    %c0_i32_21 = arith.constant 0 : i32
    %31 = arith.cmpi eq, %arg1, %c0_i32_21 : i32
    %true = arith.constant true
    %32 = arith.xori %31, %true : i1
    %33 = arith.extui %32 : i1 to i32
    %c0_i32_22 = arith.constant 0 : i32
    %34 = arith.cmpi ne, %33, %c0_i32_22 : i32
    scf.if %34 {
      %c0_25 = arith.constant 0 : index
      %c0_26 = arith.constant 0 : index
      %39 = vector.load %arg6[%c0_25, %c0_26] : memref<32x1xf32, #tpu.memory_space<vmem>>, vector<32x1xf32>
      %cst_27 = arith.constant dense<0.000000e+00> : vector<32xf32>
      %40 = vector.multi_reduction <add>, %24, %cst_27 [1] : vector<32x128xf32> to vector<32xf32>
      %41 = vector.shape_cast %40 : vector<32xf32> to vector<32x1xf32>
      %42 = arith.addf %39, %41 : vector<32x1xf32>
      %c0_28 = arith.constant 0 : index
      %c0_29 = arith.constant 0 : index
      %43 = vector.load %arg6[%c0_28, %c0_29] : memref<32x1xf32, #tpu.memory_space<vmem>>, vector<32x1xf32>
      tpu.vector_store %arg6[%c0_28, %c0_29], %42 {strides = array<i32>} : memref<32x1xf32, #tpu.memory_space<vmem>>, vector<32x1xf32>,
    } else {
    }
    %35 = arith.extui %31 : i1 to i32
    %c0_i32_23 = arith.constant 0 : i32
    %36 = arith.cmpi ne, %35, %c0_i32_23 : i32
    scf.if %36 {
      %c128_i32 = arith.constant 128 : i32
      %39 = arith.muli %arg1, %c128_i32 : i32
      %40 = tpu.iota {dimensions = array<i32: 1>} : vector<32x128xi32>
      %41 = vector.broadcast %39 : i32 to vector<32x128xi32>
      %42 = arith.addi %41, %40 : vector<32x128xi32>
      %c0_25 = arith.constant 0 : index
      %c0_26 = arith.constant 0 : index
      %43 = vector.load %arg6[%c0_25, %c0_26] : memref<32x1xf32, #tpu.memory_space<vmem>>, vector<32x1xf32>
      %c9_i32 = arith.constant 9 : i32
      %44 = vector.broadcast %c9_i32 : i32 to vector<32x128xi32>
      %45 = arith.cmpi slt, %42, %44 : vector<32x128xi32>
      %cst_27 = arith.constant 0.000000e+00 : f32
      %46 = vector.broadcast %cst_27 : f32 to vector<32x128xf32>
      %47 = arith.select %45, %24, %46 : vector<32x128xi1>, vector<32x128xf32>
      %cst_28 = arith.constant dense<0.000000e+00> : vector<32xf32>
      %48 = vector.multi_reduction <add>, %47, %cst_28 [1] : vector<32x128xf32> to vector<32xf32>
      %49 = vector.shape_cast %48 : vector<32xf32> to vector<32x1xf32>
      %50 = arith.addf %43, %49 : vector<32x1xf32>
      %c0_29 = arith.constant 0 : index
      %c0_30 = arith.constant 0 : index
      %51 = vector.load %arg6[%c0_29, %c0_30] : memref<32x1xf32, #tpu.memory_space<vmem>>, vector<32x1xf32>
      tpu.vector_store %arg6[%c0_29, %c0_30], %50 {strides = array<i32>} : memref<32x1xf32, #tpu.memory_space<vmem>>, vector<32x1xf32>,
    } else {
    }
    %37 = arith.extui %31 : i1 to i32
    %c0_i32_24 = arith.constant 0 : i32
    %38 = arith.cmpi ne, %37, %c0_i32_24 : i32
    scf.if %38 {
      %c0_25 = arith.constant 0 : index
      %c0_26 = arith.constant 0 : index
      %39 = vector.load %arg6[%c0_25, %c0_26] : memref<32x1xf32, #tpu.memory_space<vmem>>, vector<32x1xf32>
      %c0_27 = arith.constant 0 : index
      %c0_28 = arith.constant 0 : index
      %c0_29 = arith.constant 0 : index
      %40 = vector.load %arg5[%c0_27, %c0_28, %c0_29] : memref<1x32x1xf32, #tpu.memory_space<vmem>>, vector<1x32x1xf32>
      %41 = vector.shape_cast %40 : vector<1x32x1xf32> to vector<32x1xf32>
      %42 = vector.shape_cast %39 : vector<32x1xf32> to vector<1x32x1xf32>
      tpu.vector_store %arg5[%c0_27, %c0_28, %c0_29], %42 {strides = array<i32>} : memref<1x32x1xf32, #tpu.memory_space<vmem>>, vector<1x32x1xf32>,
    } else {
    }
    return
  }
  func.func @transform_0(%arg0: i32, %arg1: i32) -> (i32, i32, i32) {
    %c0_i32 = arith.constant 0 : i32
    %c0_i32_0 = arith.constant 0 : i32
    %c0_i32_1 = arith.constant 0 : i32
    %c0_i32_2 = arith.constant 0 : i32
    return %c0_i32, %c0_i32_0, %c0_i32_1 : i32, i32, i32
  }
  func.func @transform_1(%arg0: i32, %arg1: i32) -> (i32, i32, i32, i32) {
    %c0_i32 = arith.constant 0 : i32
    %c0_i32_0 = arith.constant 0 : i32
    %c0_i32_1 = arith.constant 0 : i32
    return %arg0, %arg1, %c0_i32, %c0_i32_0 : i32, i32, i32, i32
  }
  func.func @transform_2(%arg0: i32, %arg1: i32) -> (i32, i32, i32) {
    %c0_i32 = arith.constant 0 : i32
    %c0_i32_0 = arith.constant 0 : i32
    return %arg0, %c0_i32, %arg1 : i32, i32, i32
  }
  func.func @transform_3(%arg0: i32, %arg1: i32) -> (i32, i32, i32) {
    %c0_i32 = arith.constant 0 : i32
    %c0_i32_0 = arith.constant 0 : i32
    %c0_i32_1 = arith.constant 0 : i32
    return %arg0, %c0_i32, %c0_i32_0 : i32, i32, i32
  }
}

</mosaic_0001>

<llo_original>
// kernel: stft_pallas.1
$region0: #{stft_pallas.1}
  #allocation0 [shape = 'u32[]', space=smem, size = 0x4, offset = 0x4, fixed_abs, tag = 'smem constant byte address 0x4 - core index']
  #allocation1 [shape = 'u32[144,128]{1,0:T(1,128)}', space=vmem, size = 0x12000, scoped, tag = 'internal scratch']
  #allocation2 [shape = 'f32[32,1]{1,0:T(8,128)}', space=vmem, size = 0x4000, scoped, tag = 'scratch operand']
  %s0 = inlined_call_operand.vmem [shape: bf16[2,64,64], index: 0, kind: input, shape index: {}]
  %s1 = inlined_call_operand.vmem [shape: bf16[2,1,64,256], index: 1, kind: input, shape index: {}]
  %s2 = inlined_call_operand.vmem [shape: f32[2,32,128], index: 2, kind: output, shape index: {0}]
  %s3 = inlined_call_operand.vmem [shape: f32[2,32,1], index: 3, kind: output, shape index: {1}]
  %4 = xla_tuple %s2, %s3
  %s5 = sld [smem:[#allocation0]]
  $region61: #{stft_pallas.1} parent=0
    _
  %s7 = ssub.s32 1, %s5
  %s8 = scalar_select 0, %s7, %s5
  loop: start=0, step=1, limit=4
  $region2: #{stft_pallas.1} parent=0 // loop_pre_header
    _
  $region3: #{stft_pallas.1} parent=0 // loop_header
    %s10 = sphi 0, %s14
    %p11 = scmp.ge.s32.totalorder %s10, 4
    %s17 = sphi 0, %s29
    %s18 = sphi 0, %s25
    %s19 = sphi 0, %s17
    %s20 = sphi 0, %s18
    %s21 = sphi 0, %s19
    %s22 = sphi 0, %s20
    %s30 = sphi 0, %s30
    %s32 = sphi 0, %s30
    %s33 = sphi 0, %s32
    %s47 = sphi 0, %s33
    %s55 = sphi 0, %s57
    %s58 = sphi 0, %s55
    %s59 = sphi 0, %s58
    %s75 = sphi 0, %s59
    %s83 = sphi 0, %s85
    %s86 = sphi 0, %s83
    %s87 = sphi 0, %s86
    %s103 = sphi 0, %s87
    %s109 = sphi 0, %s111
    %s112 = sphi 0, %s109
    %s113 = sphi 0, %s112
    %s129 = sphi 0, %s113
  $region4: #{stft_pallas.1} parent=0 // loop_header_branch
    %13 = sbr.rel (%p11) target = $region8
  $region5: #{stft_pallas.1} parent=0 // loop_body
    %s15 = ssub.s32 %s10, 1
    %s16 = ssub.s32 %s10, 2
    %s23 = sadd.s32 1, %s18
    %p24 = scmp.ge.s32.totalorder %s23, 1
    %s25 = scalar_select %p24, 0, %s23
    %s26 = sadd.s32 1, %s17
    %s27 = scalar_select %p24, %s26, %s17
    %p28 = scmp.ge.s32.totalorder %s27, 2
    %s29 = scalar_select %p28, 0, %s27
    %s31 = sadd.s32 %s30, 1
    %p34 = scmp.eq.s32.totalorder %s10, 1
    %p35 = scmp.ne.s32.totalorder %s30, %s32
    %p36 = scmp.eq.s32.totalorder %s10, 0
    %p37 = por %p35, %p36
    %p38 = scmp.ne.s32.totalorder %s30, %s32
    %p39 = scmp.eq.s32.totalorder %s15, 1
    %p40 = por %p38, %p39
    %p41 = scmp.ne.s32.totalorder %s32, %s33
    %p42 = scmp.eq.s32.totalorder %s15, 0
    %p43 = por %p41, %p42
    %p44 = scmp.ne.s32.totalorder %s32, %s33
    %p45 = scmp.eq.s32.totalorder %s16, 1
    %p46 = por %p44, %p45
    %p48 = scmp.ne.s32.totalorder %s33, %s47
    %p49 = scmp.eq.s32.totalorder %s16, 0
    %p50 = por %p48, %p49
    %s51 = ssub.s32 %s17, %s29
    %s52 = ssub.s32 %s18, %s25
    %s53 = sor.u32 %s51, %s52
    %p54 = scmp.eq.s32.totalorder %s53, 0
    %s56 = sadd.s32 %s55, 1
    %s57 = scalar_select %p54, %s55, %s56
    %p60 = pneg %p54
    %p61 = scmp.eq.s32.totalorder %s10, 1
    %p62 = por %p60, %p61
    %p63 = scmp.ne.s32.totalorder %s55, %s58
    %p64 = scmp.eq.s32.totalorder %s10, 0
    %p65 = por %p63, %p64
    %p66 = scmp.ne.s32.totalorder %s55, %s58
    %p67 = scmp.eq.s32.totalorder %s15, 1
    %p68 = por %p66, %p67
    %p69 = scmp.ne.s32.totalorder %s58, %s59
    %p70 = scmp.eq.s32.totalorder %s15, 0
    %p71 = por %p69, %p70
    %p72 = scmp.ne.s32.totalorder %s58, %s59
    %p73 = scmp.eq.s32.totalorder %s16, 1
    %p74 = por %p72, %p73
    %p76 = scmp.ne.s32.totalorder %s59, %s75
    %p77 = scmp.eq.s32.totalorder %s16, 0
    %p78 = por %p76, %p77
    %s79 = ssub.s32 %s17, %s29
    %s80 = ssub.s32 %s18, %s25
    %s81 = sor.u32 %s79, %s80
    %p82 = scmp.eq.s32.totalorder %s81, 0
    %s84 = sadd.s32 %s83, 1
    %s85 = scalar_select %p82, %s83, %s84
    %p88 = pneg %p82
    %p89 = scmp.eq.s32.totalorder %s10, 1
    %p90 = por %p88, %p89
    %p91 = scmp.ne.s32.totalorder %s83, %s86
    %p92 = scmp.eq.s32.totalorder %s10, 0
    %p93 = por %p91, %p92
    %p94 = scmp.ne.s32.totalorder %s83, %s86
    %p95 = scmp.eq.s32.totalorder %s15, 1
    %p96 = por %p94, %p95
    %p97 = scmp.ne.s32.totalorder %s86, %s87
    %p98 = scmp.eq.s32.totalorder %s15, 0
    %p99 = por %p97, %p98
    %p100 = scmp.ne.s32.totalorder %s86, %s87
    %p101 = scmp.eq.s32.totalorder %s16, 1
    %p102 = por %p100, %p101
    %p104 = scmp.ne.s32.totalorder %s87, %s103
    %p105 = scmp.eq.s32.totalorder %s16, 0
    %p106 = por %p104, %p105
    %s107 = ssub.s32 %s17, %s29
    %p108 = scmp.eq.s32.totalorder %s107, 0
    %s110 = sadd.s32 %s109, 1
    %s111 = scalar_select %p108, %s109, %s110
    %p114 = pneg %p108
    %p115 = scmp.eq.s32.totalorder %s10, 1
    %p116 = por %p114, %p115
    %p117 = scmp.ne.s32.totalorder %s109, %s112
    %p118 = scmp.eq.s32.totalorder %s10, 0
    %p119 = por %p117, %p118
    %p120 = scmp.ne.s32.totalorder %s109, %s112
    %p121 = scmp.eq.s32.totalorder %s15, 1
    %p122 = por %p120, %p121
    %p123 = scmp.ne.s32.totalorder %s112, %s113
    %p124 = scmp.eq.s32.totalorder %s15, 0
    %p125 = por %p123, %p124
    %p126 = scmp.ne.s32.totalorder %s112, %s113
    %p127 = scmp.eq.s32.totalorder %s16, 1
    %p128 = por %p126, %p127
    %p130 = scmp.ne.s32.totalorder %s113, %s129
    %p131 = scmp.eq.s32.totalorder %s16, 0
    %p132 = por %p130, %p131
    %p133 = scmp.le.s32.totalorder 1, %s10
    %p134 = scmp.lt.s32.totalorder %s10, 3
    %p135 = pnand %p133, %p134
    %p136 = pneg %p135
    // Predicated region
    $region9: #{stft_pallas.1} parent=5 // pred_check
      _
    $region10: #{stft_pallas.1} parent=5 // pred_check_branch
      %138 = sbr.rel (%p135) target = $region12
    $region11: #{stft_pallas.1} parent=5 // pred_region
      %s139 = ssub.s32 %s10, 1
      // Predicated region
      $region13: #{stft_pallas.1} parent=11 // pred_check
        %p140 = pneg %p43
      $region14: #{stft_pallas.1} parent=11 // pred_check_branch
        %142 = sbr.rel (%p140) target = $region16
      $region15: #{stft_pallas.1} parent=11 // pred_region
        _
      $region16: #{stft_pallas.1} parent=11 // pred_fallthru
        _
    $region12: #{stft_pallas.1} parent=5 // pred_fallthru
      _
    %p143 = scmp.lt.s32.totalorder %s10, 2
    // Predicated region
    $region17: #{stft_pallas.1} parent=5 // pred_check
      %p144 = pneg %p143
    $region18: #{stft_pallas.1} parent=5 // pred_check_branch
      %146 = sbr.rel (%p144) target = $region20
    $region19: #{stft_pallas.1} parent=5 // pred_region
      // Predicated region
      $region21: #{stft_pallas.1} parent=19 // pred_check
        %p147 = pneg %p65
      $region22: #{stft_pallas.1} parent=19 // pred_check_branch
        %149 = sbr.rel (%p147) target = $region24
      $region23: #{stft_pallas.1} parent=19 // pred_region
        %p150 = scmp.lt.s32.totalorder %s17, 1
        %s151 = scalar_select %p150, %s17, 1
        %p152 = scmp.lt.s32.totalorder %s18, 0
        %s153 = scalar_select %p152, %s18, 0
        %s154 = smul.addr %s153, 16
        %s155 = smul.addr %s151, 16
        %s156 = sadd.s32 %s154, %s155
        %s157 = smul.addr %s156, 4
        %s158 = scalar_lea.vmem %s1, %s157
      $region24: #{stft_pallas.1} parent=19 // pred_fallthru
        _
    $region20: #{stft_pallas.1} parent=5 // pred_fallthru
      _
    %p159 = scmp.le.s32.totalorder 1, %s10
    %p160 = scmp.lt.s32.totalorder %s10, 3
    %p161 = pnand %p159, %p160
    %p162 = pneg %p161
    // Predicated region
    $region25: #{stft_pallas.1} parent=5 // pred_check
      _
    $region26: #{stft_pallas.1} parent=5 // pred_check_branch
      %164 = sbr.rel (%p161) target = $region28
    $region27: #{stft_pallas.1} parent=5 // pred_region
      %s165 = ssub.s32 %s10, 1
      %p166 = pneg %p43
      %p167 = pneg %p40
      %p168 = scmp.lt.s32.totalorder %s19, 1
      %s169 = scalar_select %p168, %s19, 1
      %p170 = scmp.lt.s32.totalorder %s20, 0
      %s171 = scalar_select %p170, %s20, 0
      %s172 = smul.addr %s171, 16
      %s173 = smul.addr %s169, 16
      %s174 = sadd.s32 %s172, %s173
      %s175 = smul.addr %s174, 4
      %s176 = scalar_lea.vmem %s1, %s175
      %p177 = pneg %p71
      %p178 = pneg %p68
      %p179 = pneg %p99
      %p180 = pneg %p96
      %p181 = scmp.lt.s32.totalorder %s19, 1
      %s182 = scalar_select %p181, %s19, 1
      %p183 = scmp.lt.s32.totalorder %s20, 0
      %s184 = scalar_select %p183, %s20, 0
      %s185 = smul.addr %s182, 4
      %s186 = sadd.s32 %s184, %s185
      %s187 = smul.addr %s186, 8
      %s188 = scalar_lea.vmem %s2, %s187
      %p189 = pneg %p125
      %p190 = pneg %p122
      %p191 = scmp.lt.s32.totalorder %s19, 1
      %s192 = scalar_select %p191, %s19, 1
      %s193 = smul.addr %s192, 4
      %s194 = smul.addr %s193, 8
      %s195 = scalar_lea.vmem %s3, %s194
      %p196 = scmp.lt.s32.totalorder %s19, 1
      %s197 = scalar_select %p196, %s19, 1
      %p198 = scmp.lt.s32.totalorder %s20, 0
      %s199 = scalar_select %p198, %s20, 0
      %s200 = smul.addr %s199, 16
      %s201 = smul.addr %s197, 16
      %s202 = sadd.s32 %s200, %s201
      %s203 = smul.addr %s202, 4
      %s204 = scalar_lea.vmem %s1, %s203
      %p205 = scmp.lt.s32.totalorder %s19, 1
      %s206 = scalar_select %p205, %s19, 1
      %p207 = scmp.lt.s32.totalorder %s20, 0
      %s208 = scalar_select %p207, %s20, 0
      %s209 = smul.addr %s206, 4
      %s210 = sadd.s32 %s208, %s209
      %s211 = smul.addr %s210, 8
      %s212 = scalar_lea.vmem %s2, %s211
      %p213 = scmp.lt.s32.totalorder %s19, 1
      %s214 = scalar_select %p213, %s19, 1
      %s215 = smul.addr %s214, 4
      %s216 = smul.addr %s215, 8
      %s217 = scalar_lea.vmem %s3, %s216
      %v219 = vld [vmem:[%s0] sm:$0xf]
      %v220 = vld [vmem:[%s0 + $0x4] sm:$0xf]
      %v221 = vld [vmem:[%s0 + $0x8] sm:$0xf]
      %v222 = vld [vmem:[%s0 + $0xc] sm:$0xf]
      %v223 = vld [vmem:[%s0 + $0x10] sm:$0xf]
      %v224 = vld [vmem:[%s0 + $0x14] sm:$0xf]
      %v225 = vld [vmem:[%s0 + $0x18] sm:$0xf]
      %v226 = vld [vmem:[%s0 + $0x1c] sm:$0xf]
      %v227 = vld [vmem:[%s204] sm:$0xf]
      %v228 = vld [vmem:[%s204 + $0x8] sm:$0xf]
      %v229 = vld [vmem:[%s204 + $0x10] sm:$0xf]
      %v230 = vld [vmem:[%s204 + $0x18] sm:$0xf]
      %v231 = vld [vmem:[%s204 + $0x20] sm:$0xf]
      %v232 = vld [vmem:[%s204 + $0x28] sm:$0xf]
      %v233 = vld [vmem:[%s204 + $0x30] sm:$0xf]
      %v234 = vld [vmem:[%s204 + $0x38] sm:$0xf]
      %s235 = scalar_lea.vmem %s0, 32
      %v236 = vld [vmem:[%s235] sm:$0xf]
      %v237 = vld [vmem:[%s235 + $0x4] sm:$0xf]
      %v238 = vld [vmem:[%s235 + $0x8] sm:$0xf]
      %v239 = vld [vmem:[%s235 + $0xc] sm:$0xf]
      %v240 = vld [vmem:[%s235 + $0x10] sm:$0xf]
      %v241 = vld [vmem:[%s235 + $0x14] sm:$0xf]
      %v242 = vld [vmem:[%s235 + $0x18] sm:$0xf]
      %v243 = vld [vmem:[%s235 + $0x1c] sm:$0xf]
      %v244 = vld [vmem:[%s204] sm:$0xff]
      %v245 = vld [vmem:[%s204 + $0x8] sm:$0xff]
      %v246 = vld [vmem:[%s204 + $0x10] sm:$0xff]
      %v247 = vld [vmem:[%s204 + $0x18] sm:$0xff]
      %v248 = vld [vmem:[%s204 + $0x20] sm:$0xff]
      %v249 = vld [vmem:[%s204 + $0x28] sm:$0xff]
      %v250 = vld [vmem:[%s204 + $0x30] sm:$0xff]
      %v251 = vld [vmem:[%s204 + $0x38] sm:$0xff]
      %v260 = vunpack.c.l.b16 %v236
      %v261 = vunpack.c.l.b16 %v237
      %v262 = vunpack.c.l.b16 %v238
      %v263 = vunpack.c.l.b16 %v239
      %v264 = vunpack.c.l.b16 %v240
      %v265 = vunpack.c.l.b16 %v241
      %v266 = vunpack.c.l.b16 %v242
      %v267 = vunpack.c.l.b16 %v243
      %v268 = vpack.c.b16 %v261, %v260
      %v269 = vpack.c.b16 %v263, %v262
      %v270 = vpack.c.b16 %v265, %v264
      %v271 = vpack.c.b16 %v267, %v266
      %v280 = vunpack.c.l.b16 %v244
      %v281 = vunpack.c.h.b16 %v244
      %v282 = vunpack.c.l.b16 %v245
      %v283 = vunpack.c.h.b16 %v245
      %v284 = vunpack.c.l.b16 %v246
      %v285 = vunpack.c.h.b16 %v246
      %v286 = vunpack.c.l.b16 %v247
      %v287 = vunpack.c.h.b16 %v247
      %v288 = vunpack.c.l.b16 %v248
      %v289 = vunpack.c.h.b16 %v248
      %v290 = vunpack.c.l.b16 %v249
      %v291 = vunpack.c.h.b16 %v249
      %v292 = vunpack.c.l.b16 %v250
      %v293 = vunpack.c.h.b16 %v250
      %v294 = vunpack.c.l.b16 %v251
      %v295 = vunpack.c.h.b16 %v251
      %v296 = vpack.c.b16 %v282, %v280
      %v297 = vpack.c.b16 %v283, %v281
      %v298 = vpack.c.b16 %v286, %v284
      %v299 = vpack.c.b16 %v287, %v285
      %v300 = vpack.c.b16 %v290, %v288
      %v301 = vpack.c.b16 %v291, %v289
      %v302 = vpack.c.b16 %v294, %v292
      %v303 = vpack.c.b16 %v295, %v293
      %304 = vrot.lane.b32.xlu0 %v296, 127
      %v305 = vpop.permute.xlu0 %304
      %306 = vrot.lane.b32.xlu0 %v297, 127
      %v307 = vpop.permute.xlu0 %306
      %308 = vrot.lane.b32.xlu0 %v298, 127
      %v309 = vpop.permute.xlu0 %308
      %310 = vrot.lane.b32.xlu0 %v299, 127
      %v311 = vpop.permute.xlu0 %310
      %312 = vrot.lane.b32.xlu0 %v300, 127
      %v313 = vpop.permute.xlu0 %312
      %314 = vrot.lane.b32.xlu0 %v301, 127
      %v315 = vpop.permute.xlu0 %314
      %316 = vrot.lane.b32.xlu0 %v302, 127
      %v317 = vpop.permute.xlu0 %316
      %318 = vrot.lane.b32.xlu0 %v303, 127
      %v319 = vpop.permute.xlu0 %318
      %vm320 = vcmask 1039360
      %v321 = vsel %vm320, %v305, %v307
      %v322 = vsel %vm320, %v309, %v311
      %v323 = vsel %vm320, %v313, %v315
      %v324 = vsel %vm320, %v317, %v319
      %vm329 = vcmask 523264
      %v331 = vsel %vm329, %v268, 0
      %v334 = vsel %vm329, %v269, 0
      %v337 = vsel %vm329, %v270, 0
      %v340 = vsel %vm329, %v271, 0
      %342 = vmatprep.subr.bf16.mxu0 0
      %343 = vmatpush1.bf16.msra.mxu0 0
      %344 = vmatprep.subr.bf16.mxu0 0
      %345 = vmatpush1.bf16.msra.mxu0 0
      %346 = vmatprep.subr.bf16.mxu0 0
      %347 = vmatpush1.bf16.msra.mxu0 0
      %348 = vmatprep.subr.bf16.mxu0 0
      %349 = vmatpush1.bf16.msra.mxu0 0
      %350 = vmatprep.subr.bf16.mxu0 0
      %351 = vmatpush1.bf16.msra.mxu0 %v324
      %352 = vmatprep.subr.bf16.mxu0 0
      %353 = vmatpush1.bf16.msra.mxu0 %v323
      %354 = vmatprep.subr.bf16.mxu0 0
      %355 = vmatpush1.bf16.msra.mxu0 %v322
      %356 = vmatprep.subr.bf16.mxu0 0
      %357 = vmatpush1.bf16.msra.mxu0 %v321
      %358 = vmatprep.subr.bf16.mxu0 0
      %359 = vmatpush2.bf16.msra.mxu0 0
      %360 = vmatprep.subr.bf16.mxu0 0
      %361 = vmatpush2.bf16.msra.mxu0 0
      %362 = vmatprep.subr.bf16.mxu0 0
      %363 = vmatpush2.bf16.msra.mxu0 0
      %364 = vmatprep.subr.bf16.mxu0 0
      %365 = vmatpush2.bf16.msra.mxu0 0
      %366 = vmatprep.subr.bf16.mxu0 0
      %367 = vmatpush2.bf16.msra.mxu0 0
      %368 = vmatprep.subr.bf16.mxu0 0
      %369 = vmatpush2.bf16.msra.mxu0 0
      %370 = vmatprep.subr.bf16.mxu0 0
      %371 = vmatpush2.bf16.msra.mxu0 0
      %372 = vmatprep.subr.bf16.mxu0 0
      %373 = vmatpush2.bf16.msra.mxu0 0
      %374 = vmatprep.mubr.bf16.mxu0 0
      %375 = vmatmul.mubr.bf16.gmra.mxu0 %v331
      %v376 = vpop.f32.mrf.mxu0
      %v377 = vadd.f32 0.0, %v376
      %v378 = vpop.f32.mrf.mxu0
      %v379 = vpop.f32.mrf.mxu0
      %v380 = vadd.f32 0.0, %v379
      %v381 = vpop.f32.mrf.mxu0
      %382 = vmatprep.mubr.bf16.mxu0 0
      %383 = vmatmul.mubr.bf16.gmra.mxu0 %v334
      %v384 = vpop.f32.mrf.mxu0
      %v385 = vadd.f32 0.0, %v384
      %v386 = vpop.f32.mrf.mxu0
      %v387 = vpop.f32.mrf.mxu0
      %v388 = vadd.f32 0.0, %v387
      %v389 = vpop.f32.mrf.mxu0
      %390 = vmatprep.mubr.bf16.mxu0 0
      %391 = vmatmul.mubr.bf16.gmra.mxu0 %v337
      %v392 = vpop.f32.mrf.mxu0
      %v393 = vadd.f32 0.0, %v392
      %v394 = vpop.f32.mrf.mxu0
      %v395 = vpop.f32.mrf.mxu0
      %v396 = vadd.f32 0.0, %v395
      %v397 = vpop.f32.mrf.mxu0
      %398 = vmatprep.mubr.bf16.mxu0 0
      %399 = vmatmul.mubr.bf16.gmra.mxu0 %v340
      %v400 = vpop.f32.mrf.mxu0
      %v401 = vadd.f32 0.0, %v400
      %v402 = vpop.f32.mrf.mxu0
      %v403 = vpop.f32.mrf.mxu0
      %v404 = vadd.f32 0.0, %v403
      %v405 = vpop.f32.mrf.mxu0
      %406 = vdwg.mxu0
      %v415 = vunpack.c.l.b16 %v219
      %v416 = vunpack.c.l.b16 %v220
      %v417 = vunpack.c.l.b16 %v221
      %v418 = vunpack.c.l.b16 %v222
      %v419 = vunpack.c.l.b16 %v223
      %v420 = vunpack.c.l.b16 %v224
      %v421 = vunpack.c.l.b16 %v225
      %v422 = vunpack.c.l.b16 %v226
      %v423 = vpack.c.b16 %v416, %v415
      %v424 = vpack.c.b16 %v418, %v417
      %v425 = vpack.c.b16 %v420, %v419
      %v426 = vpack.c.b16 %v422, %v421
      %v435 = vunpack.c.l.b16 %v227
      %v436 = vunpack.c.l.b16 %v228
      %v437 = vunpack.c.l.b16 %v229
      %v438 = vunpack.c.l.b16 %v230
      %v439 = vunpack.c.l.b16 %v231
      %v440 = vunpack.c.l.b16 %v232
      %v441 = vunpack.c.l.b16 %v233
      %v442 = vunpack.c.l.b16 %v234
      %v443 = vpack.c.b16 %v436, %v435
      %v444 = vpack.c.b16 %v438, %v437
      %v445 = vpack.c.b16 %v440, %v439
      %v446 = vpack.c.b16 %v442, %v441
      %v452 = vsel %vm329, %v423, 0
      %v455 = vsel %vm329, %v424, 0
      %v458 = vsel %vm329, %v425, 0
      %v461 = vsel %vm329, %v426, 0
      %463 = vmatprep.subr.bf16.mxu0 0
      %464 = vmatpush1.bf16.msra.mxu0 0
      %465 = vmatprep.subr.bf16.mxu0 0
      %466 = vmatpush1.bf16.msra.mxu0 0
      %467 = vmatprep.subr.bf16.mxu0 0
      %468 = vmatpush1.bf16.msra.mxu0 0
      %469 = vmatprep.subr.bf16.mxu0 0
      %470 = vmatpush1.bf16.msra.mxu0 0
      %471 = vmatprep.subr.bf16.mxu0 0
      %472 = vmatpush1.bf16.msra.mxu0 %v446
      %473 = vmatprep.subr.bf16.mxu0 0
      %474 = vmatpush1.bf16.msra.mxu0 %v445
      %475 = vmatprep.subr.bf16.mxu0 0
      %476 = vmatpush1.bf16.msra.mxu0 %v444
      %477 = vmatprep.subr.bf16.mxu0 0
      %478 = vmatpush1.bf16.msra.mxu0 %v443
      %479 = vmatprep.subr.bf16.mxu0 0
      %480 = vmatpush2.bf16.msra.mxu0 0
      %481 = vmatprep.subr.bf16.mxu0 0
      %482 = vmatpush2.bf16.msra.mxu0 0
      %483 = vmatprep.subr.bf16.mxu0 0
      %484 = vmatpush2.bf16.msra.mxu0 0
      %485 = vmatprep.subr.bf16.mxu0 0
      %486 = vmatpush2.bf16.msra.mxu0 0
      %487 = vmatprep.subr.bf16.mxu0 0
      %488 = vmatpush2.bf16.msra.mxu0 0
      %489 = vmatprep.subr.bf16.mxu0 0
      %490 = vmatpush2.bf16.msra.mxu0 0
      %491 = vmatprep.subr.bf16.mxu0 0
      %492 = vmatpush2.bf16.msra.mxu0 0
      %493 = vmatprep.subr.bf16.mxu0 0
      %494 = vmatpush2.bf16.msra.mxu0 0
      %495 = vmatprep.mubr.bf16.mxu0 0
      %496 = vmatmul.mubr.bf16.gmra.mxu0 %v452
      %v497 = vpop.f32.mrf.mxu0
      %v498 = vadd.f32 %v377, %v497
      %v499 = vpop.f32.mrf.mxu0
      %v500 = vpop.f32.mrf.mxu0
      %v501 = vadd.f32 %v380, %v500
      %v502 = vpop.f32.mrf.mxu0
      %503 = vmatprep.mubr.bf16.mxu0 0
      %504 = vmatmul.mubr.bf16.gmra.mxu0 %v455
      %v505 = vpop.f32.mrf.mxu0
      %v506 = vadd.f32 %v385, %v505
      %v507 = vpop.f32.mrf.mxu0
      %v508 = vpop.f32.mrf.mxu0
      %v509 = vadd.f32 %v388, %v508
      %v510 = vpop.f32.mrf.mxu0
      %511 = vmatprep.mubr.bf16.mxu0 0
      %512 = vmatmul.mubr.bf16.gmra.mxu0 %v458
      %v513 = vpop.f32.mrf.mxu0
      %v514 = vadd.f32 %v393, %v513
      %v515 = vpop.f32.mrf.mxu0
      %v516 = vpop.f32.mrf.mxu0
      %v517 = vadd.f32 %v396, %v516
      %v518 = vpop.f32.mrf.mxu0
      %519 = vmatprep.mubr.bf16.mxu0 0
      %520 = vmatmul.mubr.bf16.gmra.mxu0 %v461
      %v521 = vpop.f32.mrf.mxu0
      %v522 = vadd.f32 %v401, %v521
      %v523 = vpop.f32.mrf.mxu0
      %v524 = vpop.f32.mrf.mxu0
      %v525 = vadd.f32 %v404, %v524
      %v526 = vpop.f32.mrf.mxu0
      %527 = vdwg.mxu0
      %v528 = vmul.f32 %v498, %v498
      %v529 = vmul.f32 %v501, %v501
      %v530 = vmul.f32 %v506, %v506
      %v531 = vmul.f32 %v509, %v509
      %v532 = vmul.f32 %v514, %v514
      %v533 = vmul.f32 %v517, %v517
      %v534 = vmul.f32 %v522, %v522
      %v535 = vmul.f32 %v525, %v525
      %v536 = vadd.f32 %v528, %v532
      %v537 = vadd.f32 %v529, %v533
      %v538 = vadd.f32 %v530, %v534
      %v539 = vadd.f32 %v531, %v535
      %v540 = vmax.f32 %v536, 1.0658141e-14
      %v541 = vmax.f32 %v537, 1.0658141e-14
      %v542 = vmax.f32 %v538, 1.0658141e-14
      %v543 = vmax.f32 %v539, 1.0658141e-14
      %v544 = vlog2.pop %v540
      %v545 = vmul.f32 %v544, 0.6931472
      %v546 = vlog2.pop %v541
      %v547 = vmul.f32 %v546, 0.6931472
      %v548 = vlog2.pop %v542
      %v549 = vmul.f32 %v548, 0.6931472
      %v550 = vlog2.pop %v543
      %v551 = vmul.f32 %v550, 0.6931472
      %v552 = vmul.f32 %v545, 0.4342945
      %v553 = vmul.f32 %v547, 0.4342945
      %v554 = vmul.f32 %v549, 0.4342945
      %v555 = vmul.f32 %v551, 0.4342945
      %v556 = vmul.f32 %v552, 10.0
      %v557 = vmul.f32 %v553, 10.0
      %v558 = vmul.f32 %v554, 10.0
      %v559 = vmul.f32 %v555, 10.0
      %v560 = vsub.f32 %v556, 16.812412
      %v561 = vsub.f32 %v557, 16.812412
      %v562 = vsub.f32 %v558, 16.812412
      %v563 = vsub.f32 %v559, 16.812412
      %564 = vst [vmem:[%s212] sm:$0xff] %v560
      %565 = vst [vmem:[%s212 + $0x8] sm:$0xff] %v561
      %566 = vst [vmem:[%s212 + $0x10] sm:$0xff] %v562
      %567 = vst [vmem:[%s212 + $0x18] sm:$0xff] %v563
      %p568 = scmp.eq.s32.totalorder %s20, 0
      // Predicated region
      $region29: #{stft_pallas.1} parent=27 // pred_check
        %p569 = pneg %p568
      $region30: #{stft_pallas.1} parent=27 // pred_check_branch
        %571 = sbr.rel (%p569) target = $region32
      $region31: #{stft_pallas.1} parent=27 // pred_region
        %vm572 = vcmask 7168
        %573 = vst.msk [vmem:[#allocation2] sm:$0xff] %vm572, 0.0
        %574 = vst.msk [vmem:[#allocation2 + $0x8] sm:$0xff] %vm572, 0.0
        %575 = vst.msk [vmem:[#allocation2 + $0x10] sm:$0xff] %vm572, 0.0
        %576 = vst.msk [vmem:[#allocation2 + $0x18] sm:$0xff] %vm572, 0.0
      $region32: #{stft_pallas.1} parent=27 // pred_fallthru
        _
      %p577 = scmp.ne.s32.totalorder %s20, 0
      // Predicated region
      $region33: #{stft_pallas.1} parent=27 // pred_check
        %p578 = pneg %p577
      $region34: #{stft_pallas.1} parent=27 // pred_check_branch
        %580 = sbr.rel (%p578) target = $region36
      $region35: #{stft_pallas.1} parent=27 // pred_region
        %v581 = vld [vmem:[#allocation2] sm:$0xff]
        %v582 = vld [vmem:[#allocation2 + $0x8] sm:$0xff]
        %v583 = vld [vmem:[#allocation2 + $0x10] sm:$0xff]
        %v584 = vld [vmem:[#allocation2 + $0x18] sm:$0xff]
        %585 = vadd.xlane.f32.xlu0 %v560
        %v586 = vpop.xlane.xlu0 %585
        %587 = vadd.xlane.f32.xlu0 %v561
        %v588 = vpop.xlane.xlu0 %587
        %589 = vadd.xlane.f32.xlu0 %v562
        %v590 = vpop.xlane.xlu0 %589
        %591 = vadd.xlane.f32.xlu0 %v563
        %v592 = vpop.xlane.xlu0 %591
        %v593 = vadd.f32 %v581, %v586
        %v594 = vadd.f32 %v582, %v588
        %v595 = vadd.f32 %v583, %v590
        %v596 = vadd.f32 %v584, %v592
        %vm597 = vcmask 7168
        %598 = vst.msk [vmem:[#allocation2] sm:$0xff] %vm597, %v593
        %599 = vst.msk [vmem:[#allocation2 + $0x8] sm:$0xff] %vm597, %v594
        %600 = vst.msk [vmem:[#allocation2 + $0x10] sm:$0xff] %vm597, %v595
        %601 = vst.msk [vmem:[#allocation2 + $0x18] sm:$0xff] %vm597, %v596
      $region36: #{stft_pallas.1} parent=27 // pred_fallthru
        _
      // Predicated region
      $region37: #{stft_pallas.1} parent=27 // pred_check
        %p602 = pneg %p568
      $region38: #{stft_pallas.1} parent=27 // pred_check_branch
        %604 = sbr.rel (%p602) target = $region40
      $region39: #{stft_pallas.1} parent=27 // pred_region
        %s605 = smul.u32 %s20, 128
        %v606 = vlaneseq
        %v607 = vand.u32 %v606, 127
        %v608 = vstv %s605
        %v609 = vadd.s32 %v608, %v607
        %v610 = vld [vmem:[#allocation2] sm:$0xff]
        %v611 = vld [vmem:[#allocation2 + $0x8] sm:$0xff]
        %v612 = vld [vmem:[#allocation2 + $0x10] sm:$0xff]
        %v613 = vld [vmem:[#allocation2 + $0x18] sm:$0xff]
        %vm614 = vcmp.lt.s32.totalorder %v609, 9
        %v615 = vsel %vm614, %v560, 0.0
        %v616 = vsel %vm614, %v561, 0.0
        %v617 = vsel %vm614, %v562, 0.0
        %v618 = vsel %vm614, %v563, 0.0
        %619 = vadd.xlane.f32.xlu0 %v615
        %v620 = vpop.xlane.xlu0 %619
        %621 = vadd.xlane.f32.xlu0 %v616
        %v622 = vpop.xlane.xlu0 %621
        %623 = vadd.xlane.f32.xlu0 %v617
        %v624 = vpop.xlane.xlu0 %623
        %625 = vadd.xlane.f32.xlu0 %v618
        %v626 = vpop.xlane.xlu0 %625
        %v627 = vadd.f32 %v610, %v620
        %v628 = vadd.f32 %v611, %v622
        %v629 = vadd.f32 %v612, %v624
        %v630 = vadd.f32 %v613, %v626
        %vm631 = vcmask 7168
        %632 = vst.msk [vmem:[#allocation2] sm:$0xff] %vm631, %v627
        %633 = vst.msk [vmem:[#allocation2 + $0x8] sm:$0xff] %vm631, %v628
        %634 = vst.msk [vmem:[#allocation2 + $0x10] sm:$0xff] %vm631, %v629
        %635 = vst.msk [vmem:[#allocation2 + $0x18] sm:$0xff] %vm631, %v630
        %v636 = vld [vmem:[#allocation2] sm:$0xff]
        %v637 = vld [vmem:[#allocation2 + $0x8] sm:$0xff]
        %v638 = vld [vmem:[#allocation2 + $0x10] sm:$0xff]
        %v639 = vld [vmem:[#allocation2 + $0x18] sm:$0xff]
        %640 = vst.msk [vmem:[%s217] sm:$0xff] %vm631, %v636
        %641 = vst.msk [vmem:[%s217 + $0x8] sm:$0xff] %vm631, %v637
        %642 = vst.msk [vmem:[%s217 + $0x10] sm:$0xff] %vm631, %v638
        %643 = vst.msk [vmem:[%s217 + $0x18] sm:$0xff] %vm631, %v639
      $region40: #{stft_pallas.1} parent=27 // pred_fallthru
        _
      %p644 = scmp.lt.s32.totalorder %s19, 1
      %s645 = scalar_select %p644, %s19, 1
      %p646 = scmp.lt.s32.totalorder %s20, 0
      %s647 = scalar_select %p646, %s20, 0
      %s648 = smul.addr %s645, 4
      %s649 = sadd.s32 %s647, %s648
      %s650 = smul.addr %s649, 8
      %s651 = scalar_lea.vmem %s2, %s650
      %p652 = scmp.lt.s32.totalorder %s19, 1
      %s653 = scalar_select %p652, %s19, 1
      %s654 = smul.addr %s653, 4
      %s655 = smul.addr %s654, 8
      %s656 = scalar_lea.vmem %s3, %s655
      // Predicated region
      $region41: #{stft_pallas.1} parent=27 // pred_check
        %p657 = pneg %p96
      $region42: #{stft_pallas.1} parent=27 // pred_check_branch
        %659 = sbr.rel (%p657) target = $region44
      $region43: #{stft_pallas.1} parent=27 // pred_region
        _
      $region44: #{stft_pallas.1} parent=27 // pred_fallthru
        _
      // Predicated region
      $region45: #{stft_pallas.1} parent=27 // pred_check
        %p660 = pneg %p122
      $region46: #{stft_pallas.1} parent=27 // pred_check_branch
        %662 = sbr.rel (%p660) target = $region48
      $region47: #{stft_pallas.1} parent=27 // pred_region
        _
      $region48: #{stft_pallas.1} parent=27 // pred_fallthru
        _
    $region28: #{stft_pallas.1} parent=5 // pred_fallthru
      _
    %p663 = scmp.le.s32.totalorder 2, %s10
    // Predicated region
    $region49: #{stft_pallas.1} parent=5 // pred_check
      %p664 = pneg %p663
    $region50: #{stft_pallas.1} parent=5 // pred_check_branch
      %666 = sbr.rel (%p664) target = $region52
    $region51: #{stft_pallas.1} parent=5 // pred_region
      %s667 = ssub.s32 %s10, 2
      // Predicated region
      $region53: #{stft_pallas.1} parent=51 // pred_check
        %p668 = pneg %p102
      $region54: #{stft_pallas.1} parent=51 // pred_check_branch
        %670 = sbr.rel (%p668) target = $region56
      $region55: #{stft_pallas.1} parent=51 // pred_region
        %p671 = scmp.lt.s32.totalorder %s21, 1
        %s672 = scalar_select %p671, %s21, 1
        %p673 = scmp.lt.s32.totalorder %s22, 0
        %s674 = scalar_select %p673, %s22, 0
        %s675 = smul.addr %s672, 4
        %s676 = sadd.s32 %s674, %s675
        %s677 = smul.addr %s676, 8
        %s678 = scalar_lea.vmem %s2, %s677
      $region56: #{stft_pallas.1} parent=51 // pred_fallthru
        _
      // Predicated region
      $region57: #{stft_pallas.1} parent=51 // pred_check
        %p679 = pneg %p128
      $region58: #{stft_pallas.1} parent=51 // pred_check_branch
        %681 = sbr.rel (%p679) target = $region60
      $region59: #{stft_pallas.1} parent=51 // pred_region
        %p682 = scmp.lt.s32.totalorder %s21, 1
        %s683 = scalar_select %p682, %s21, 1
        %s684 = smul.addr %s683, 4
        %s685 = smul.addr %s684, 8
        %s686 = scalar_lea.vmem %s3, %s685
      $region60: #{stft_pallas.1} parent=51 // pred_fallthru
        _
    $region52: #{stft_pallas.1} parent=5 // pred_fallthru
      _
  $region6: #{stft_pallas.1} parent=0 // loop_footer
    %s14 = sadd.s32 1, %s10
  $region7: #{stft_pallas.1} parent=0 // loop_footer_branch
    %9 = sbr.rel target = $region3
  $region8: #{stft_pallas.1} parent=0 // loop_exit
    _

</llo_original>
